<compile_context>
chip_gen: v7x
topology: tpu7x:2x2x1
jax: 0.10.0
libtpu: 0.0.40
codegen_flags: <defaults>
</compile_context>

<pallas_src>
import jax
import jax.numpy as jnp
from jax.experimental import pallas as pl
from jax.experimental.pallas import tpu as pltpu

_LANES = 128
_SUBLANES = 8
_TARGET_BLOCK_BYTES = 2 << 20  # ~2 MiB per block; 4x double-buffered (in+out) ~ 8 MiB VMEM


def _copy_kernel(val_ref, o_ref):
    # Pure materialization of the stored constant: out = val (native dtype,
    # no upcast -> keeps the kernel strictly DMA/HBM-bandwidth bound).
    o_ref[...] = val_ref[...]


def _always_pallas(val):
    """Materialize the stored constant `val` via a tiled Pallas copy."""
    orig_shape = val.shape
    n = int(val.size)

    if n % _LANES == 0:
        # Lane-dense layout: flatten to (rows, 128) so the trailing block dim
        # is exactly the 128-lane axis -> unmasked vector stores.
        rows = n // _LANES
        flat = val.reshape(rows, _LANES)

        bytes_per_row = _LANES * flat.dtype.itemsize
        target_rows = max(_SUBLANES, _TARGET_BLOCK_BYTES // bytes_per_row)
        target_rows = (target_rows // _SUBLANES) * _SUBLANES

        if rows % _SUBLANES == 0 and rows > target_rows:
            tile_rows = target_rows          # multiple of 8 -> legal sub-tiling
        else:
            tile_rows = rows                 # full-array block (always legal)

        grid = (pl.cdiv(rows, tile_rows),)
        out = pl.pallas_call(
            _copy_kernel,
            out_shape=jax.ShapeDtypeStruct((rows, _LANES), flat.dtype),
            grid=grid,
            in_specs=[pl.BlockSpec((tile_rows, _LANES), lambda i: (i, 0))],
            out_specs=pl.BlockSpec((tile_rows, _LANES), lambda i: (i, 0)),
            compiler_params=pltpu.CompilerParams(
                dimension_semantics=("parallel",)),
        )(flat)
        return out.reshape(orig_shape)

    # Fallback for sizes not divisible by 128: single full-array block
    # (block shape equal to the array dims is always legal).
    flat = val.reshape(1, n)
    out = pl.pallas_call(
        _copy_kernel,
        out_shape=jax.ShapeDtypeStruct((1, n), flat.dtype),
        grid=(1,),
        in_specs=[pl.BlockSpec((1, n), lambda i: (0, 0))],
        out_specs=pl.BlockSpec((1, n), lambda i: (0, 0)),
    )(flat)
    return out.reshape(orig_shape)


class Always:
    """JAX/Pallas equivalent of the PyTorch `Always` module."""

    def __init__(self, val):
        self.val = val

    def __call__(self, *args, **kwargs):
        # forward(*args, **kwargs) -> self.val ; every call-time input ignored.
        if isinstance(self.val, jax.Array):
            return _always_pallas(self.val)
        # TODO(synk): non-tensor `val` (Python scalar / None) has no tensor op
        # to lower to Pallas; it is returned as-is, matching PyTorch exactly.
        return self.val


if __name__ == "__main__":
    key = jax.random.PRNGKey(0)
    k_val, k_x = jax.random.split(key)

    # Small shapes implied by the module's typical use in a transformer block:
    # batch=2, seq=8, hidden=32.
    B, S, H = 2, 8, 32
    val = jax.random.normal(k_val, (B, S, H), dtype=jnp.float32)  # stored constant
    x = jax.random.normal(k_x, (B, S, H), dtype=jnp.float32)      # ignored call arg

    # Tensor-valued Always: output is exactly the stored constant, inputs ignored.
    mod = Always(val)
    out = jax.block_until_ready(mod(x, some_kwarg=123))

    assert out.shape == val.shape and out.dtype == val.dtype
    assert jnp.allclose(out, val), "Always(val)(x) must equal val"

    # Scalar-valued Always: plain passthrough (matches PyTorch semantics).
    assert Always(0.5)(x) == 0.5
    assert Always(None)(x) is None

    print("KERNEL_OK")
</pallas_src>

<mosaic_0001>
module attributes {stable_mosaic.version = 11 : i64} {
  func.func @_copy_kernel(%arg0: i32, %arg1: memref<4x128xf32, #tpu.memory_space<vmem>>, %arg2: memref<4x128xf32, #tpu.memory_space<vmem>>) attributes {dimension_semantics = [#tpu.dimension_semantics<parallel>], iteration_bounds = array<i64: 1>, scalar_prefetch = 0 : i64, scratch_operands = 0 : i64, tpu.core_type = #tpu.core_type<tc>, window_params = [{transform_indices = @transform_0, window_bounds = array<i64: 4, 128>}, {transform_indices = @transform_1, window_bounds = array<i64: 4, 128>}]} {
    %c0 = arith.constant 0 : index
    %c0_0 = arith.constant 0 : index
    %0 = vector.load %arg1[%c0, %c0_0] : memref<4x128xf32, #tpu.memory_space<vmem>>, vector<4x128xf32>
    %c0_1 = arith.constant 0 : index
    %c0_2 = arith.constant 0 : index
    %1 = vector.load %arg2[%c0_1, %c0_2] : memref<4x128xf32, #tpu.memory_space<vmem>>, vector<4x128xf32>
    tpu.vector_store %arg2[%c0_1, %c0_2], %0 {strides = array<i32>} : memref<4x128xf32, #tpu.memory_space<vmem>>, vector<4x128xf32>,
    return
  }
  func.func @transform_0(%arg0: i32) -> (i32, i32) {
    %c0_i32 = arith.constant 0 : i32
    %c0_i32_0 = arith.constant 0 : i32
    return %arg0, %c0_i32 : i32, i32
  }
  func.func @transform_1(%arg0: i32) -> (i32, i32) {
    %c0_i32 = arith.constant 0 : i32
    %c0_i32_0 = arith.constant 0 : i32
    return %arg0, %c0_i32 : i32, i32
  }
}

</mosaic_0001>

<llo_original>
// kernel: tpu_custom_call.1
$region0: #{tpu_custom_call.1}
  #allocation0 [shape = 'u32[]', space=smem, size = 0x4, offset = 0x4, fixed_abs, tag = 'smem constant byte address 0x4 - core index']
  #allocation1 [shape = 'u32[144,128]{1,0:T(1,128)}', space=vmem, size = 0x12000, scoped, tag = 'internal scratch']
  %s0 = inlined_call_operand.hbm [shape: f32[4,128], index: 0, kind: input, shape index: {}]
  %s1 = inlined_call_operand.hbm [shape: f32[4,128], index: 1, kind: output, shape index: {}]
  %s2 = sld [smem:[#allocation0]]
  $region18: #{tpu_custom_call.1} parent=0
    _
  %s4 = ssub.s32 1, %s2
  %s5 = scalar_select 0, %s4, %s2
  $region1: #{tpu_custom_call.1} parent=0
    #allocation2 [shape = 'u8[2048]{0}', space=vmem, size = 0x800, scoped, tag = 'input window, operand 0, single buffered']
    #allocation3 [shape = 's32[1]{0}', space=sflag, size = 0x4, scoped, tag = 'scoped memory for tpu_custom_call.1']
    #allocation4 [shape = 's32[1]{0}', space=sflag, size = 0x4, scoped, tag = 'scoped memory for tpu_custom_call.1']
    #allocation5 [shape = 'u8[2048]{0}', space=vmem, size = 0x800, scoped, tag = 'output window, operand 0, single buffered']
    %6 = vsyncpa [#allocation3], 0
    %7 = vsyncpa [#allocation4], 0
    // Predicated region
    $region2: #{tpu_custom_call.1} parent=1 // pred_check
      _
    $region3: #{tpu_custom_call.1} parent=1 // pred_check_branch
      %9 = sbr.rel (0) target = $region5
    $region4: #{tpu_custom_call.1} parent=1 // pred_region
      %s11 = ssub.s32 64, 64
      %12 = vsyncadd [#allocation3], %s11
      %s14 = sshll.u32 [#allocation2], 4
      %s15 = int_to_ptr.vmem [resolvable:$true] %s14
      %17 = dma.hbm_to_vmem [thread:$0]  %s0, 64, %s15, [#allocation3]
    $region5: #{tpu_custom_call.1} parent=1 // pred_fallthru
      _
    // Predicated region
    $region6: #{tpu_custom_call.1} parent=1 // pred_check
      _
    $region7: #{tpu_custom_call.1} parent=1 // pred_check_branch
      %19 = sbr.rel (0) target = $region9
    $region8: #{tpu_custom_call.1} parent=1 // pred_region
      %20 = dma.done [#allocation3], 64
    $region9: #{tpu_custom_call.1} parent=1 // pred_fallthru
      _
    %v21 = vld [vmem:[#allocation2] sm:$0xf]
    %22 = vst [vmem:[#allocation5] sm:$0xf] %v21
    // Predicated region
    $region10: #{tpu_custom_call.1} parent=1 // pred_check
      _
    $region11: #{tpu_custom_call.1} parent=1 // pred_check_branch
      %24 = sbr.rel (0) target = $region13
    $region12: #{tpu_custom_call.1} parent=1 // pred_region
      %s26 = ssub.s32 64, 64
      %27 = vsyncadd [#allocation4], %s26
      %s29 = sshll.u32 [#allocation5], 4
      %s30 = int_to_ptr.vmem [resolvable:$true] %s29
      %32 = dma.vmem_to_hbm [thread:$0]  %s30, 64, %s1, [#allocation4]
    $region13: #{tpu_custom_call.1} parent=1 // pred_fallthru
      _
    // Predicated region
    $region14: #{tpu_custom_call.1} parent=1 // pred_check
      _
    $region15: #{tpu_custom_call.1} parent=1 // pred_check_branch
      %34 = sbr.rel (0) target = $region17
    $region16: #{tpu_custom_call.1} parent=1 // pred_region
      %35 = dma.done [#allocation4], 64
    $region17: #{tpu_custom_call.1} parent=1 // pred_fallthru
      _
    %36 = vsyncpa [#allocation3], 1
    %37 = vsyncpa [#allocation4], 1

</llo_original>
